<compile_context>
chip_gen: v7x
topology: tpu7x:2x2x1
jax: 0.10.0
libtpu: 0.0.40
codegen_flags: <defaults>
</compile_context>

<pallas_src>
import jax
import jax.numpy as jnp
from jax.experimental import pallas as pl
from jax.experimental.pallas import tpu as pltpu

LANES = 128
ROW_GRANULE = 8            # f32 sublane granule: blocks must be (8k, 128)
TARGET_BLOCK_ROWS = 4096   # (4096, 128) f32 = 2 MiB per slab per grid step


def _gating_kernel(params_ref, w_ref, s_ref, o_ref):
    # params_ref lives in SMEM: [alpha, beta]
    alpha = params_ref[0]
    beta = params_ref[1]
    gate = jax.nn.sigmoid(alpha * s_ref[...] + beta)
    o_ref[...] = w_ref[...] * gate


def _round_up(x, m):
    return ((x + m - 1) // m) * m


@jax.jit
def gating_denoising(edge_weights, scores, edge_index, alpha, beta):
    """edge_weights: (E,) f32, scores: (N,) f32, edge_index: (2, E) int32."""
    E = edge_weights.shape[0]

    # Adaptive tiling: pad E only to the vreg granule, then split rows into
    # n_blocks blocks of at most TARGET_BLOCK_ROWS rows each (rows rounded up
    # to a multiple of ROW_GRANULE so every block is (8k, 128)-aligned).
    rows_min = _round_up(pl.cdiv(E, LANES), ROW_GRANULE)
    n_blocks = pl.cdiv(rows_min, TARGET_BLOCK_ROWS)
    if rows_min >= 2 * ROW_GRANULE:
        # >= 2 (and even) grid steps so the "parallel" axis shards across both
        # TensorCores on v7x (no effect on single-TC v5e/v6e).
        n_blocks = max(n_blocks, 2)
        n_blocks += n_blocks % 2
    block_rows = _round_up(pl.cdiv(rows_min, n_blocks), ROW_GRANULE)
    rows = n_blocks * block_rows
    pad = rows * LANES - E

    def to_slab(v):
        # Written as one expression so XLA keeps gather/add/pad/reshape in a
        # single loop fusion (and allow_input_fusion below may pull it into
        # the pallas_call input reads entirely).
        return jnp.pad(v.astype(jnp.float32), (0, pad)).reshape(rows, LANES)

    i = edge_index[0]
    j = edge_index[1]
    # Gather + pre-sum done in plain JAX; the kernel then reads a single score
    # slab instead of two.
    s2 = to_slab(jnp.take(scores, i) + jnp.take(scores, j))
    w2 = to_slab(edge_weights)
    params = jnp.stack([alpha, beta]).astype(jnp.float32)

    tile_spec = pl.BlockSpec((block_rows, LANES), lambda r: (r, 0))

    out2 = pl.pallas_call(
        _gating_kernel,
        out_shape=jax.ShapeDtypeStruct((rows, LANES), jnp.float32),
        grid_spec=pl.GridSpec(
            grid=(n_blocks,),
            in_specs=[
                pl.BlockSpec(memory_space=pltpu.SMEM),  # [alpha, beta]
                tile_spec,  # edge_weights slab
                tile_spec,  # scores[i] + scores[j] slab
            ],
            out_specs=tile_spec,
        ),
        compiler_params=pltpu.CompilerParams(
            dimension_semantics=("parallel",),
            allow_input_fusion=[False, True, True],
        ),
    )(params, w2, s2)

    return out2.reshape(-1)[:E]


def _reference(edge_weights, scores, edge_index, alpha, beta):
    i, j = edge_index[0], edge_index[1]
    gate = jax.nn.sigmoid(alpha * (scores[i] + scores[j]) + beta)
    return edge_weights * gate


def _run_case(key, num_nodes, num_edges, alpha, beta):
    k1, k2, k3, k4 = jax.random.split(key, 4)
    edge_weights = jax.random.uniform(k1, (num_edges,), dtype=jnp.float32)
    scores = jax.random.normal(k2, (num_nodes,), dtype=jnp.float32)
    edge_index = jnp.stack(
        [
            jax.random.randint(k3, (num_edges,), 0, num_nodes, dtype=jnp.int32),
            jax.random.randint(k4, (num_edges,), 0, num_nodes, dtype=jnp.int32),
        ],
        axis=0,
    )

    out = gating_denoising(edge_weights, scores, edge_index, alpha, beta)
    out = jax.block_until_ready(out)

    ref = _reference(edge_weights, scores, edge_index, alpha, beta)
    assert out.shape == (num_edges,)
    assert jnp.allclose(out, ref, atol=1e-5, rtol=1e-5), "mismatch vs reference"


if __name__ == "__main__":
    key = jax.random.PRNGKey(0)
    k_small, k_large = jax.random.split(key, 2)

    # Parameters, deterministically initialized per the module's __init__.
    alpha = jnp.float32(1.0)
    beta = jnp.float32(0.0)

    # Small case: exercises padding to the (8,128) granule, grid == (1,).
    _run_case(k_small, num_nodes=32, num_edges=1000, alpha=alpha, beta=beta)

    # Larger case: exercises the multi-block (>= 2, even) parallel grid path.
    _run_case(k_large, num_nodes=64, num_edges=50_000, alpha=alpha, beta=beta)

    print("KERNEL_OK")
</pallas_src>

<mosaic_0001>
module attributes {stable_mosaic.version = 11 : i64} {
  func.func @_gating_kernel(%arg0: i32, %arg1: memref<2xf32, #tpu.memory_space<smem>>, %arg2: memref<8x128xf32, #tpu.memory_space<vmem>>, %arg3: memref<8x128xf32, #tpu.memory_space<vmem>>, %arg4: memref<8x128xf32, #tpu.memory_space<vmem>>) attributes {dimension_semantics = [#tpu.dimension_semantics<parallel>], iteration_bounds = array<i64: 1>, scalar_prefetch = 0 : i64, scratch_operands = 0 : i64, tpu.core_type = #tpu.core_type<tc>, window_params = [{transform_indices = @transform_0, window_bounds = array<i64: 2>}, {transform_indices = @transform_1, window_bounds = array<i64: 8, 128>}, {transform_indices = @transform_2, window_bounds = array<i64: 8, 128>}, {transform_indices = @transform_3, window_bounds = array<i64: 8, 128>}]} {
    %c0 = arith.constant 0 : index
    %0 = memref.load %arg1[%c0] : memref<2xf32, #tpu.memory_space<smem>>
    %c1 = arith.constant 1 : index
    %1 = memref.load %arg1[%c1] : memref<2xf32, #tpu.memory_space<smem>>
    %c0_0 = arith.constant 0 : index
    %c0_1 = arith.constant 0 : index
    %2 = vector.load %arg3[%c0_0, %c0_1] : memref<8x128xf32, #tpu.memory_space<vmem>>, vector<8x128xf32>
    %3 = vector.broadcast %0 : f32 to vector<8x128xf32>
    %4 = arith.mulf %3, %2 : vector<8x128xf32>
    %5 = vector.broadcast %1 : f32 to vector<8x128xf32>
    %6 = arith.addf %4, %5 : vector<8x128xf32>
    %7 = arith.negf %6 : vector<8x128xf32>
    %8 = math.exp %7 : vector<8x128xf32>
    %cst = arith.constant 1.000000e+00 : f32
    %9 = vector.broadcast %cst : f32 to vector<8x128xf32>
    %10 = arith.addf %9, %8 : vector<8x128xf32>
    %11 = arith.divf %9, %10 : vector<8x128xf32>
    %c0_2 = arith.constant 0 : index
    %c0_3 = arith.constant 0 : index
    %12 = vector.load %arg2[%c0_2, %c0_3] : memref<8x128xf32, #tpu.memory_space<vmem>>, vector<8x128xf32>
    %13 = arith.mulf %12, %11 : vector<8x128xf32>
    %c0_4 = arith.constant 0 : index
    %c0_5 = arith.constant 0 : index
    %14 = vector.load %arg4[%c0_4, %c0_5] : memref<8x128xf32, #tpu.memory_space<vmem>>, vector<8x128xf32>
    tpu.vector_store %arg4[%c0_4, %c0_5], %13 {strides = array<i32>} : memref<8x128xf32, #tpu.memory_space<vmem>>, vector<8x128xf32>,
    return
  }
  func.func @transform_0(%arg0: i32) -> i32 {
    %c0_i32 = arith.constant 0 : i32
    %c0_i32_0 = arith.constant 0 : i32
    return %c0_i32 : i32
  }
  func.func @transform_1(%arg0: i32) -> (i32, i32) {
    %c0_i32 = arith.constant 0 : i32
    %c0_i32_0 = arith.constant 0 : i32
    return %arg0, %c0_i32 : i32, i32
  }
  func.func @transform_2(%arg0: i32) -> (i32, i32) {
    %c0_i32 = arith.constant 0 : i32
    %c0_i32_0 = arith.constant 0 : i32
    return %arg0, %c0_i32 : i32, i32
  }
  func.func @transform_3(%arg0: i32) -> (i32, i32) {
    %c0_i32 = arith.constant 0 : i32
    %c0_i32_0 = arith.constant 0 : i32
    return %arg0, %c0_i32 : i32, i32
  }
}

</mosaic_0001>

<llo_original>
// kernel: gating_denoising.2
$region0: #{gating_denoising.2}
  #allocation0 [shape = 'u32[]', space=smem, size = 0x4, offset = 0x4, fixed_abs, tag = 'smem constant byte address 0x4 - core index']
  #allocation1 [shape = 'u32[144,128]{1,0:T(1,128)}', space=vmem, size = 0x12000, scoped, tag = 'internal scratch']
  #allocation2 [shape = 'u32[2048]{0}', space=vmem, size = 0x2000, scoped, tag = 'scoped memory for gating_denoising.2']
  #allocation3 [shape = 'u32[2048]{0}', space=vmem, size = 0x2000, scoped, tag = 'scoped memory for gating_denoising.2']
  #allocation4 [shape = 'u32[2048]{0}', space=vmem, size = 0x2000, scoped, tag = 'scoped memory for gating_denoising.2']
  #allocation5 [shape = 'u32[2048]{0}', space=vmem, size = 0x2000, scoped, tag = 'scoped memory for gating_denoising.2']
  #allocation6 [shape = 'u32[2048]{0}', space=vmem, size = 0x2000, scoped, tag = 'scoped memory for gating_denoising.2']
  #allocation7 [shape = 'u32[2048]{0}', space=vmem, size = 0x2000, scoped, tag = 'scoped memory for gating_denoising.2']
  #allocation8 [shape = 'u32[2048]{0}', space=vmem, size = 0x2000, scoped, tag = 'scoped memory for gating_denoising.2']
  #allocation9 [shape = 'u32[2048]{0}', space=vmem, size = 0x2000, scoped, tag = 'scoped memory for gating_denoising.2']
  #allocation10 [shape = 'u32[2048]{0}', space=vmem, size = 0x2000, scoped, tag = 'scoped memory for gating_denoising.2']
  #allocation11 [shape = 'u32[2048]{0}', space=vmem, size = 0x2000, scoped, tag = 'scoped memory for gating_denoising.2']
  %s0 = inlined_call_operand.vmem [shape: f32[2], index: 0, kind: input, shape index: {}]
  %s1 = inlined_call_operand.vmem [shape: f32[1000], index: 1, kind: input, shape index: {}]
  %s2 = inlined_call_operand.<no memory space> [shape: f32[], index: 2, kind: input, shape index: {}]
  %s3 = inlined_call_operand.vmem [shape: f32[1000], index: 3, kind: input, shape index: {}]
  %s4 = inlined_call_operand.hbm [shape: f32[8,128], index: 4, kind: output, shape index: {}]
  %s5 = sld [smem:[#allocation0]]
  $region26: #{gating_denoising.2} parent=0
    _
  %s7 = ssub.s32 1, %s5
  %s8 = scalar_select 0, %s7, %s5
  %v9 = vstv %s2
  %v10 = vstv %s2
  $region1: #{gating_denoising.2} parent=0
    #allocation12 [shape = 'u8[512]{0}', space=smem, size = 0x200, scoped, tag = 'input window, operand 0, single buffered']
    #allocation13 [shape = 's32[1]{0}', space=sflag, size = 0x4, scoped, tag = 'scoped memory for gating_denoising.2']
    #allocation14 [shape = 's32[1]{0}', space=sflag, size = 0x4, scoped, tag = 'scoped memory for gating_denoising.2']
    #allocation15 [shape = 'u8[4096]{0}', space=vmem, size = 0x1000, scoped, tag = 'output window, operand 0, single buffered']
    #allocation16 [shape = 'u8[4096]{0}', space=vmem, size = 0x1000, dematerialized = true, scoped, tag = 'FusionAdapter Buffer %fusion.2 = f32[8,128]{1,0:T(8,128)} fusion(%param_3.4, %param_2.13), kind=kLoop, calls=%fused_computation.4.clone, metadata={op_name="jit(gating_denoising)/reshape" stack_frame_id=20}']
    #allocation17 [shape = 'u8[4096]{0}', space=vmem, size = 0x1000, dematerialized = true, scoped, tag = 'FusionAdapter Buffer %fusion.1 = f32[8,128]{1,0:T(8,128)} fusion(%param_1.15, %param_2.13), kind=kLoop, calls=%fused_computation.3.clone, metadata={op_name="jit(gating_denoising)/reshape" stack_frame_id=16}']
    %11 = vsyncpa [#allocation14], 0
    %12 = vsyncpa [#allocation13], 0
    // Predicated region
    $region2: #{gating_denoising.2} parent=1 // pred_check
      _
    $region3: #{gating_denoising.2} parent=1 // pred_check_branch
      %14 = sbr.rel (0) target = $region5
    $region4: #{gating_denoising.2} parent=1 // pred_region
      %s16 = ssub.s32 16, 16
      %17 = vsyncadd [#allocation14], %s16
      %s19 = sshll.u32 %s0, 4
      %s20 = int_to_ptr.vmem [resolvable:$true] %s19
      %22 = dma.vmem_to_smem %s20, 16, [#allocation12], [#allocation14]
    $region5: #{gating_denoising.2} parent=1 // pred_fallthru
      _
    // Predicated region
    $region6: #{gating_denoising.2} parent=1 // pred_check
      _
    $region7: #{gating_denoising.2} parent=1 // pred_check_branch
      %24 = sbr.rel (0) target = $region9
    $region8: #{gating_denoising.2} parent=1 // pred_region
      _
    $region9: #{gating_denoising.2} parent=1 // pred_fallthru
      _
    // Predicated region
    $region10: #{gating_denoising.2} parent=1 // pred_check
      _
    $region11: #{gating_denoising.2} parent=1 // pred_check_branch
      %26 = sbr.rel (0) target = $region13
    $region12: #{gating_denoising.2} parent=1 // pred_region
      _
    $region13: #{gating_denoising.2} parent=1 // pred_fallthru
      _
    // Predicated region
    $region14: #{gating_denoising.2} parent=1 // pred_check
      _
    $region15: #{gating_denoising.2} parent=1 // pred_check_branch
      %28 = sbr.rel (0) target = $region17
    $region16: #{gating_denoising.2} parent=1 // pred_region
      %29 = dma.done [#allocation14], 16
    $region17: #{gating_denoising.2} parent=1 // pred_fallthru
      _
    %30 = sfence
    %v31 = vld [vmem:[%s3] sm:$0xff]
    %v32 = vlaneseq
    %vm34 = vcmp.lt.s32.totalorder %v32, 1000
    %v35 = vsel %vm34, %v31, %v9
    %37 = vst [vmem:[#allocation16] sm:$0xff] %v35
    %v38 = vld [vmem:[%s1] sm:$0xff]
    %v39 = vlaneseq
    %vm41 = vcmp.lt.s32.totalorder %v39, 1000
    %v42 = vsel %vm41, %v38, %v10
    %44 = vst [vmem:[#allocation17] sm:$0xff] %v42
    %s45 = sld [smem:[#allocation12]]
    %s46 = sld [smem:[#allocation12 + $0x1]]
    %v47 = vld [vmem:[#allocation17] sm:$0xff]
    %v48 = vstv %s45
    %v49 = vmul.f32 %v48, %v47
    %v50 = vstv %s46
    %v51 = vadd.f32 %v49, %v50
    %v52 = vxor.u32 %v51, 2147483648
    %v53 = vmul.f32 %v52, 1.442695
    %v54 = vpow.pop %v53
    %v55 = vadd.f32 %v54, 1.0
    %v56 = vrcp.pop %v55
    %v57 = vmul.f32 1.0, %v56
    %v58 = vld [vmem:[#allocation16] sm:$0xff]
    %v59 = vmul.f32 %v58, %v57
    %60 = vst [vmem:[#allocation15] sm:$0xff] %v59
    // Predicated region
    $region18: #{gating_denoising.2} parent=1 // pred_check
      _
    $region19: #{gating_denoising.2} parent=1 // pred_check_branch
      %62 = sbr.rel (0) target = $region21
    $region20: #{gating_denoising.2} parent=1 // pred_region
      %s64 = ssub.s32 128, 128
      %65 = vsyncadd [#allocation13], %s64
      %s67 = sshll.u32 [#allocation15], 4
      %s68 = int_to_ptr.vmem [resolvable:$true] %s67
      %70 = dma.vmem_to_hbm [thread:$0]  %s68, 128, %s4, [#allocation13]
    $region21: #{gating_denoising.2} parent=1 // pred_fallthru
      _
    // Predicated region
    $region22: #{gating_denoising.2} parent=1 // pred_check
      _
    $region23: #{gating_denoising.2} parent=1 // pred_check_branch
      %72 = sbr.rel (0) target = $region25
    $region24: #{gating_denoising.2} parent=1 // pred_region
      %73 = dma.done [#allocation13], 128
    $region25: #{gating_denoising.2} parent=1 // pred_fallthru
      _
    %74 = vsyncpa [#allocation13], 1
    %75 = vsyncpa [#allocation14], 1

</llo_original>
